<compile_context>
chip_gen: v7x
topology: tpu7x:2x2x1
jax: 0.10.0
libtpu: 0.0.40
codegen_flags: <defaults>
</compile_context>

<pallas_src>
import functools

import jax
import jax.numpy as jnp
from jax.experimental import pallas as pl
from jax.experimental.pallas import tpu as pltpu


def fused_linear_relu_kernel(x_ref, w_ref, b_ref, o_ref):
    # Single folded Linear: (TB, 21) @ (21, 16) + (1, 16), then ReLU.
    y = jnp.dot(x_ref[...], w_ref[...], preferred_element_type=jnp.float32)
    y = y + b_ref[...]
    o_ref[...] = jnp.maximum(y, 0.0).astype(o_ref.dtype)


def mlp_forward(x, w1, b1, w2, b2, w3, b3, *, tb=1024):
    """Forward pass of the PyTorch Model (3 Linears + final ReLU)."""
    # Exact algebraic fold (no nonlinearity between layers).  Done in the
    # wrapper so XLA folds it at compile time when the weights are constants.
    w = w1 @ w2 @ w3                      # (21, 16)
    b = (b1 @ w2 + b2) @ w3 + b3          # (1, 16)

    B, f_in = x.shape
    f_out = w.shape[1]

    if B <= tb:
        # Tiny case: whole problem fits in a few vregs -> no grid, all VMEM.
        vmem = pl.BlockSpec(memory_space=pltpu.MemorySpace.VMEM)
        return pl.pallas_call(
            fused_linear_relu_kernel,
            out_shape=jax.ShapeDtypeStruct((B, f_out), jnp.float32),
            in_specs=[vmem, vmem, vmem],
            out_specs=vmem,
        )(x, w, b)

    # Large-batch path: tile the batch axis only (feature dims are a single
    # lane tile each).  tb must be a multiple of 8 (sublane granularity).
    assert tb % 8 == 0
    grid = (pl.cdiv(B, tb),)
    return pl.pallas_call(
        fused_linear_relu_kernel,
        out_shape=jax.ShapeDtypeStruct((B, f_out), jnp.float32),
        grid_spec=pltpu.PrefetchScalarGridSpec(
            num_scalar_prefetch=0,
            grid=grid,
            in_specs=[
                pl.BlockSpec((tb, f_in), lambda i: (i, 0)),      # x rows
                pl.BlockSpec((f_in, f_out), lambda i: (0, 0)),   # folded W
                pl.BlockSpec((1, f_out), lambda i: (0, 0)),      # folded b
            ],
            out_specs=pl.BlockSpec((tb, f_out), lambda i: (i, 0)),
        ),
        compiler_params=pltpu.CompilerParams(
            dimension_semantics=("parallel",),  # megacore split on v7x
        ),
    )(x, w, b)


def init_linear_params(key, in_features, out_features):
    # Mimic torch.nn.Linear default init: U(-1/sqrt(in), 1/sqrt(in)).
    k_w, k_b = jax.random.split(key)
    bound = 1.0 / (in_features ** 0.5)
    # Weight stored already transposed to (in, out) so forward is x @ W.
    w = jax.random.uniform(k_w, (in_features, out_features), jnp.float32, -bound, bound)
    b = jax.random.uniform(k_b, (1, out_features), jnp.float32, -bound, bound)
    return w, b


def _reference(x, w1, b1, w2, b2, w3, b3):
    return jnp.maximum(((x @ w1 + b1) @ w2 + b2) @ w3 + b3, 0.0)


if __name__ == "__main__":
    key = jax.random.PRNGKey(0)
    k_x, k_x2, k1, k2, k3 = jax.random.split(key, 5)

    w1, b1 = init_linear_params(k1, 21, 21)
    w2, b2 = init_linear_params(k2, 21, 5)
    w3, b3 = init_linear_params(k3, 5, 16)

    fwd = jax.jit(functools.partial(mlp_forward, tb=1024))

    # Small-batch path (no grid).
    batch = 8
    x = jax.random.normal(k_x, (batch, 21), jnp.float32)
    out = fwd(x, w1, b1, w2, b2, w3, b3)
    jax.block_until_ready(out)
    ref = _reference(x, w1, b1, w2, b2, w3, b3)
    assert out.shape == (batch, 16)
    assert jnp.allclose(out, ref, atol=1e-5, rtol=1e-5)

    # Exercise the batch-tiled (gridded, "parallel") path with a small tb.
    fwd_tiled = jax.jit(functools.partial(mlp_forward, tb=16))
    batch2 = 64
    x2 = jax.random.normal(k_x2, (batch2, 21), jnp.float32)
    out2 = fwd_tiled(x2, w1, b1, w2, b2, w3, b3)
    jax.block_until_ready(out2)
    ref2 = _reference(x2, w1, b1, w2, b2, w3, b3)
    assert out2.shape == (batch2, 16)
    assert jnp.allclose(out2, ref2, atol=1e-5, rtol=1e-5)

    print("KERNEL_OK")
</pallas_src>

<mosaic_0001>
module attributes {stable_mosaic.version = 11 : i64} {
  func.func @fused_linear_relu_kernel(%arg0: memref<8x21xf32, #tpu.memory_space<vmem>>, %arg1: memref<21x16xf32, #tpu.memory_space<vmem>>, %arg2: memref<1x16xf32, #tpu.memory_space<vmem>>, %arg3: memref<8x16xf32, #tpu.memory_space<vmem>>) attributes {dimension_semantics = [], scalar_prefetch = 0 : i64, scratch_operands = 0 : i64, tpu.core_type = #tpu.core_type<tc>} {
    %c0 = arith.constant 0 : index
    %c0_0 = arith.constant 0 : index
    %0 = vector.load %arg0[%c0, %c0_0] : memref<8x21xf32, #tpu.memory_space<vmem>>, vector<8x21xf32>
    %c0_1 = arith.constant 0 : index
    %c0_2 = arith.constant 0 : index
    %1 = vector.load %arg1[%c0_1, %c0_2] : memref<21x16xf32, #tpu.memory_space<vmem>>, vector<21x16xf32>
    %cst = arith.constant dense<0.000000e+00> : vector<8x16xf32>
    %2 = tpu.matmul %0, %1, %cst {dimension_numbers = #tpu.dot_dimension_numbers<[1], [0], [0], [1], [0, 0, 1, 1], [], []>} : vector<8x21xf32>, vector<21x16xf32>, vector<8x16xf32> -> vector<8x16xf32>
    %c0_3 = arith.constant 0 : index
    %c0_4 = arith.constant 0 : index
    %3 = vector.load %arg2[%c0_3, %c0_4] : memref<1x16xf32, #tpu.memory_space<vmem>>, vector<1x16xf32>
    %4 = vector.broadcast %3 : vector<1x16xf32> to vector<8x16xf32>
    %5 = arith.addf %2, %4 : vector<8x16xf32>
    %cst_5 = arith.constant 0.000000e+00 : f32
    %6 = vector.broadcast %cst_5 : f32 to vector<8x16xf32>
    %7 = arith.maximumf %5, %6 : vector<8x16xf32>
    %c0_6 = arith.constant 0 : index
    %c0_7 = arith.constant 0 : index
    %8 = vector.load %arg3[%c0_6, %c0_7] : memref<8x16xf32, #tpu.memory_space<vmem>>, vector<8x16xf32>
    tpu.vector_store %arg3[%c0_6, %c0_7], %7 {strides = array<i32>} : memref<8x16xf32, #tpu.memory_space<vmem>>, vector<8x16xf32>,
    return
  }
}

</mosaic_0001>

<llo_original>
// kernel: mlp_forward.1
$region0: #{mlp_forward.1}
  #allocation0 [shape = 'u32[]', space=smem, size = 0x4, offset = 0x4, fixed_abs, tag = 'smem constant byte address 0x4 - core index']
  #allocation1 [shape = 'u32[144,128]{1,0:T(1,128)}', space=vmem, size = 0x12000, scoped, tag = 'internal scratch']
  %s0 = inlined_call_operand.vmem [shape: f32[8,21], index: 0, kind: input, shape index: {}]
  %s1 = inlined_call_operand.vmem [shape: f32[21,16], index: 1, kind: input, shape index: {}]
  %s2 = inlined_call_operand.vmem [shape: f32[1,16], index: 2, kind: input, shape index: {}]
  %s3 = inlined_call_operand.hbm [shape: f32[8,16], index: 3, kind: output, shape index: {}]
  %s4 = sld [smem:[#allocation0]]
  $region22: #{mlp_forward.1} parent=0
    _
  %s6 = ssub.s32 1, %s4
  %s7 = scalar_select 0, %s6, %s4
  $region1: #{mlp_forward.1} parent=0
    #allocation2 [shape = 'u8[4096]{0}', space=vmem, size = 0x1000, scoped, tag = 'output window, operand 0, single buffered']
    #allocation3 [shape = 's32[1]{0}', space=sflag, size = 0x4, scoped, tag = 'scoped memory for mlp_forward.1']
    %8 = vsyncpa [#allocation3], 0
    // Predicated region
    $region2: #{mlp_forward.1} parent=1 // pred_check
      _
    $region3: #{mlp_forward.1} parent=1 // pred_check_branch
      %10 = sbr.rel (0) target = $region5
    $region4: #{mlp_forward.1} parent=1 // pred_region
      _
    $region5: #{mlp_forward.1} parent=1 // pred_fallthru
      _
    // Predicated region
    $region6: #{mlp_forward.1} parent=1 // pred_check
      _
    $region7: #{mlp_forward.1} parent=1 // pred_check_branch
      %12 = sbr.rel (0) target = $region9
    $region8: #{mlp_forward.1} parent=1 // pred_region
      _
    $region9: #{mlp_forward.1} parent=1 // pred_fallthru
      _
    // Predicated region
    $region10: #{mlp_forward.1} parent=1 // pred_check
      _
    $region11: #{mlp_forward.1} parent=1 // pred_check_branch
      %14 = sbr.rel (0) target = $region13
    $region12: #{mlp_forward.1} parent=1 // pred_region
      _
    $region13: #{mlp_forward.1} parent=1 // pred_fallthru
      _
    %v15 = vld [vmem:[%s0] sm:$0xff]
    %v16 = vld [vmem:[%s1] sm:$0xff]
    %v17 = vld [vmem:[%s1 + $0x8] sm:$0xff]
    %v18 = vld [vmem:[%s1 + $0x10] sm:$0x1f]
    %v19 = vld [vmem:[%s2] sm:$0x1]
    %v21 = vlaneseq
    %v22 = vshrl.u32 %v21, 7
    %v23 = vsub.s32 0, %v22
    %v24 = vrot.slane %v19, %v23
    %vm26 = vcmask 171008
    %v28 = vsel %vm26, %v15, 0
    %vm30 = vcmask 1044480
    %v32 = vsel %vm30, %v18, 0
    %34 = vmatprep.subr.mxu0 0.0
    %35 = vmatpush1.msra.mxu0 %v16
    %36 = vmatprep.subr.mxu0 0.0
    %37 = vmatpush1.msra.mxu0 %v17
    %38 = vmatprep.subr.mxu0 0.0
    %39 = vmatpush1.msra.mxu0 %v32
    %40 = vmatprep.subr.mxu0 0.0
    %41 = vmatpush1.msra.mxu0 0.0
    %42 = vmatprep.subr.mxu0 0.0
    %43 = vmatpush1.msra.mxu0 0.0
    %44 = vmatprep.subr.mxu0 0.0
    %45 = vmatpush1.msra.mxu0 0.0
    %46 = vmatprep.subr.mxu0 0.0
    %47 = vmatpush1.msra.mxu0 0.0
    %48 = vmatprep.subr.mxu0 0.0
    %49 = vmatpush1.msra.mxu0 0.0
    %50 = vmatprep.subr.mxu0 0.0
    %51 = vmatpush1.msra.mxu0 0.0
    %52 = vmatprep.subr.mxu0 0.0
    %53 = vmatpush1.msra.mxu0 0.0
    %54 = vmatprep.subr.mxu0 0.0
    %55 = vmatpush1.msra.mxu0 0.0
    %56 = vmatprep.subr.mxu0 0.0
    %57 = vmatpush1.msra.mxu0 0.0
    %58 = vmatprep.subr.mxu0 0.0
    %59 = vmatpush1.msra.mxu0 0.0
    %60 = vmatprep.subr.mxu0 0.0
    %61 = vmatpush1.msra.mxu0 0.0
    %62 = vmatprep.subr.mxu0 0.0
    %63 = vmatpush1.msra.mxu0 0.0
    %64 = vmatprep.subr.mxu0 0.0
    %65 = vmatpush1.msra.mxu0 0.0
    %66 = vmatprep.subr.mxu0 0.0
    %67 = vmatpush1.msra.mxu0 0.0
    %68 = vmatprep.subr.mxu0 0.0
    %69 = vmatpush1.msra.mxu0 0.0
    %70 = vmatprep.subr.mxu0 0.0
    %71 = vmatpush1.msra.mxu0 0.0
    %72 = vmatprep.subr.mxu0 0.0
    %73 = vmatpush1.msra.mxu0 0.0
    %74 = vmatprep.subr.mxu0 0.0
    %75 = vmatpush1.msra.mxu0 0.0
    %76 = vmatprep.subr.mxu0 0.0
    %77 = vmatpush1.msra.mxu0 0.0
    %78 = vmatprep.subr.mxu0 0.0
    %79 = vmatpush1.msra.mxu0 0.0
    %80 = vmatprep.subr.mxu0 0.0
    %81 = vmatpush1.msra.mxu0 0.0
    %82 = vmatprep.subr.mxu0 0.0
    %83 = vmatpush1.msra.mxu0 0.0
    %84 = vmatprep.subr.mxu0 0.0
    %85 = vmatpush1.msra.mxu0 0.0
    %86 = vmatprep.subr.mxu0 0.0
    %87 = vmatpush1.msra.mxu0 0.0
    %88 = vmatprep.subr.mxu0 0.0
    %89 = vmatpush1.msra.mxu0 0.0
    %90 = vmatprep.subr.mxu0 0.0
    %91 = vmatpush1.msra.mxu0 0.0
    %92 = vmatprep.subr.mxu0 0.0
    %93 = vmatpush1.msra.mxu0 0.0
    %94 = vmatprep.subr.mxu0 0.0
    %95 = vmatpush1.msra.mxu0 0.0
    %96 = vmatprep.subr.mxu0 0.0
    %97 = vmatpush1.msra.mxu0 0.0
    %98 = vmatprep.mubr.f32.mxu0 0.0
    %99 = vmatmul.mubr.f32.gmra.mrb[0].mxu0 %v28
    %v100 = vpop.f32.mrb[0].mxu0
    %v101 = vadd.f32 %v24, %v100
    %v102 = vpop.f32.mrb[0].mxu0
    %103 = vdwg.mxu0
    %v104 = vmax.f32 %v101, 0.0
    %vm105 = vcmask 130048
    %106 = vst.msk [vmem:[#allocation2] sm:$0xff] %vm105, %v104
    // Predicated region
    $region14: #{mlp_forward.1} parent=1 // pred_check
      _
    $region15: #{mlp_forward.1} parent=1 // pred_check_branch
      %108 = sbr.rel (0) target = $region17
    $region16: #{mlp_forward.1} parent=1 // pred_region
      %s110 = ssub.s32 128, 128
      %111 = vsyncadd [#allocation3], %s110
      %s113 = sshll.u32 [#allocation2], 4
      %s114 = int_to_ptr.vmem [resolvable:$true] %s113
      %116 = dma.vmem_to_hbm [thread:$0]  %s114, 128, %s3, [#allocation3]
    $region17: #{mlp_forward.1} parent=1 // pred_fallthru
      _
    // Predicated region
    $region18: #{mlp_forward.1} parent=1 // pred_check
      _
    $region19: #{mlp_forward.1} parent=1 // pred_check_branch
      %118 = sbr.rel (0) target = $region21
    $region20: #{mlp_forward.1} parent=1 // pred_region
      %119 = dma.done [#allocation3], 128
    $region21: #{mlp_forward.1} parent=1 // pred_fallthru
      _
    %120 = vsyncpa [#allocation3], 1

</llo_original>
